<compile_context>
chip_gen: v5e
topology: v5e:2x2
jax: 0.10.0
libtpu: 0.0.40
codegen_flags: <defaults>
</compile_context>

<pallas_src>
import functools

import jax
import jax.numpy as jnp
from jax.experimental import pallas as pl
from jax.experimental.pallas import tpu as pltpu


_SQRT_HALF = 0.7071067811865476


def _erf(x):
    # Abramowitz & Stegun 7.1.26 rational approximation, |err| <= 1.5e-7.
    # Uses only exp / mul / add / div -> guaranteed Mosaic lowering (EUP + VPU),
    # and matches torch.nn.functional.gelu's exact (erf) default to ~1e-7.
    a1, a2, a3, a4, a5 = (0.254829592, -0.284496736, 1.421413741,
                          -1.453152027, 1.061405429)
    p = 0.3275911
    ax = jnp.abs(x)
    t = 1.0 / (1.0 + p * ax)
    poly = ((((a5 * t + a4) * t + a3) * t + a2) * t + a1) * t
    y = 1.0 - poly * jnp.exp(-ax * ax)
    return jnp.where(x < 0.0, -y, y)


def _gelu_exact(x):
    return 0.5 * x * (1.0 + _erf(x * _SQRT_HALF))


def _ffn_kernel(x_ref, w1_ref, b1_ref, w2_ref, b2_ref, out_ref):
    x = x_ref[...]                                                   # (tm, D)
    # proj_ff: (tm, D) @ (D, d_ff) -> f32 accumulation on the MXU
    h = jnp.dot(x, w1_ref[...], preferred_element_type=jnp.float32) + b1_ref[...]
    # exact (erf) GELU in f32, same semantics as torch.nn.functional.gelu default
    h = _gelu_exact(h)
    # proj_out: (tm, d_ff) @ (d_ff, D)
    out = jnp.dot(h.astype(w2_ref.dtype), w2_ref[...],
                  preferred_element_type=jnp.float32) + b2_ref[...]
    out_ref[...] = out.astype(out_ref.dtype)


def _pick_row_tile(m, max_rows=512):
    if m <= max_rows:
        return m
    for tm in (512, 256, 128, 64, 32, 16, 8):
        if m % tm == 0:
            return tm
    return m


def position_wise_feed_forward(x, params, *, compute_dtype=None):
    """x: (B, S, d_model). params: {'w1','b1','w2','b2'}. Returns (B, S, d_model)."""
    B, S, D = x.shape
    d_ff = params["w1"].shape[1]
    M = B * S

    # Collapse batch*seq into one token axis -> one (or few) big grid steps.
    x2 = x.reshape(M, D)
    w1, w2 = params["w1"], params["w2"]
    b1, b2 = params["b1"], params["b2"]
    if compute_dtype is not None:                 # e.g. bf16 on v6e/v7x
        x2 = x2.astype(compute_dtype)
        w1 = w1.astype(compute_dtype)
        w2 = w2.astype(compute_dtype)

    tm = _pick_row_tile(M)
    grid = (M // tm,)

    out = pl.pallas_call(
        _ffn_kernel,
        out_shape=jax.ShapeDtypeStruct((M, D), x.dtype),
        grid_spec=pltpu.PrefetchScalarGridSpec(
            num_scalar_prefetch=0,
            grid=grid,
            in_specs=[
                pl.BlockSpec((tm, D), lambda i: (i, 0)),      # x rows
                pl.BlockSpec((D, d_ff), lambda i: (0, 0)),    # W1 (resident)
                pl.BlockSpec((1, d_ff), lambda i: (0, 0)),    # b1
                pl.BlockSpec((d_ff, D), lambda i: (0, 0)),    # W2 (resident)
                pl.BlockSpec((1, D), lambda i: (0, 0)),       # b2
            ],
            out_specs=pl.BlockSpec((tm, D), lambda i: (i, 0)),
        ),
        compiler_params=pltpu.CompilerParams(
            dimension_semantics=("parallel",)),
    )(x2, w1, b1, w2, b2)
    return out.reshape(B, S, D)


def _reference(x, params):
    """Plain-JAX reference mirroring the PyTorch forward (exact GELU)."""
    h = x @ params["w1"] + params["b1"][0]
    h = jax.nn.gelu(h, approximate=False)
    return h @ params["w2"] + params["b2"][0]


if __name__ == "__main__":
    # Small shapes consistent with the module: batch=2, seq=8, d_model=32, d_ff=64
    B, S, d_model, d_ff = 2, 8, 32, 64

    key = jax.random.PRNGKey(0)
    kx, k1, kb1, k2, kb2 = jax.random.split(key, 5)

    x = jax.random.normal(kx, (B, S, d_model), dtype=jnp.float32)
    params = {
        "w1": 0.05 * jax.random.normal(k1, (d_model, d_ff), dtype=jnp.float32),
        "b1": 0.01 * jax.random.normal(kb1, (1, d_ff), dtype=jnp.float32),
        "w2": 0.05 * jax.random.normal(k2, (d_ff, d_model), dtype=jnp.float32),
        "b2": 0.01 * jax.random.normal(kb2, (1, d_model), dtype=jnp.float32),
    }

    out = position_wise_feed_forward(x, params)     # f32: bit-for-bit PyTorch semantics
    out = jax.block_until_ready(out)

    ref = _reference(x, params)
    assert jnp.allclose(out, ref, atol=1e-5, rtol=1e-5), "output mismatch"

    # TODO(synk): on v6e/v7x pass compute_dtype=jnp.bfloat16 for ~2x MXU rate /
    # half the weight DMA bytes (f32 accumulation is kept inside the kernel).

    print("KERNEL_OK")
</pallas_src>

<mosaic_0001>
module attributes {stable_mosaic.version = 11 : i64} {
  func.func @_ffn_kernel(%arg0: i32, %arg1: memref<16x32xf32, #tpu.memory_space<vmem>>, %arg2: memref<32x64xf32, #tpu.memory_space<vmem>>, %arg3: memref<1x64xf32, #tpu.memory_space<vmem>>, %arg4: memref<64x32xf32, #tpu.memory_space<vmem>>, %arg5: memref<1x32xf32, #tpu.memory_space<vmem>>, %arg6: memref<16x32xf32, #tpu.memory_space<vmem>>) attributes {dimension_semantics = [#tpu.dimension_semantics<parallel>], iteration_bounds = array<i64: 1>, scalar_prefetch = 0 : i64, scratch_operands = 0 : i64, tpu.core_type = #tpu.core_type<tc>, window_params = [{transform_indices = @transform_0, window_bounds = array<i64: 16, 32>}, {pipeline_mode = #tpu.pipeline_mode<synchronous>, transform_indices = @transform_1, window_bounds = array<i64: 32, 64>}, {pipeline_mode = #tpu.pipeline_mode<synchronous>, transform_indices = @transform_2, window_bounds = array<i64: 1, 64>}, {pipeline_mode = #tpu.pipeline_mode<synchronous>, transform_indices = @transform_3, window_bounds = array<i64: 64, 32>}, {pipeline_mode = #tpu.pipeline_mode<synchronous>, transform_indices = @transform_4, window_bounds = array<i64: 1, 32>}, {transform_indices = @transform_5, window_bounds = array<i64: 16, 32>}]} {
    %c0 = arith.constant 0 : index
    %c0_0 = arith.constant 0 : index
    %0 = vector.load %arg1[%c0, %c0_0] : memref<16x32xf32, #tpu.memory_space<vmem>>, vector<16x32xf32>
    %c0_1 = arith.constant 0 : index
    %c0_2 = arith.constant 0 : index
    %1 = vector.load %arg2[%c0_1, %c0_2] : memref<32x64xf32, #tpu.memory_space<vmem>>, vector<32x64xf32>
    %cst = arith.constant dense<0.000000e+00> : vector<16x64xf32>
    %2 = tpu.matmul %0, %1, %cst {dimension_numbers = #tpu.dot_dimension_numbers<[1], [0], [0], [1], [0, 0, 1, 1], [], []>} : vector<16x32xf32>, vector<32x64xf32>, vector<16x64xf32> -> vector<16x64xf32>
    %c0_3 = arith.constant 0 : index
    %c0_4 = arith.constant 0 : index
    %3 = vector.load %arg3[%c0_3, %c0_4] : memref<1x64xf32, #tpu.memory_space<vmem>>, vector<1x64xf32>
    %4 = vector.broadcast %3 : vector<1x64xf32> to vector<16x64xf32>
    %5 = arith.addf %2, %4 : vector<16x64xf32>
    %cst_5 = arith.constant 5.000000e-01 : f32
    %6 = vector.broadcast %cst_5 : f32 to vector<16x64xf32>
    %7 = arith.mulf %6, %5 : vector<16x64xf32>
    %cst_6 = arith.constant 0.707106769 : f32
    %8 = vector.broadcast %cst_6 : f32 to vector<16x64xf32>
    %9 = arith.mulf %5, %8 : vector<16x64xf32>
    %10 = math.absf %9 : vector<16x64xf32>
    %cst_7 = arith.constant 0.327591091 : f32
    %11 = vector.broadcast %cst_7 : f32 to vector<16x64xf32>
    %12 = arith.mulf %11, %10 : vector<16x64xf32>
    %cst_8 = arith.constant 1.000000e+00 : f32
    %13 = vector.broadcast %cst_8 : f32 to vector<16x64xf32>
    %14 = arith.addf %13, %12 : vector<16x64xf32>
    %cst_9 = arith.constant 1.000000e+00 : f32
    %15 = vector.broadcast %cst_9 : f32 to vector<16x64xf32>
    %16 = arith.divf %15, %14 : vector<16x64xf32>
    %cst_10 = arith.constant 1.06140542 : f32
    %17 = vector.broadcast %cst_10 : f32 to vector<16x64xf32>
    %18 = arith.mulf %17, %16 : vector<16x64xf32>
    %cst_11 = arith.constant -1.45315206 : f32
    %19 = vector.broadcast %cst_11 : f32 to vector<16x64xf32>
    %20 = arith.addf %18, %19 : vector<16x64xf32>
    %21 = arith.mulf %20, %16 : vector<16x64xf32>
    %cst_12 = arith.constant 1.42141378 : f32
    %22 = vector.broadcast %cst_12 : f32 to vector<16x64xf32>
    %23 = arith.addf %21, %22 : vector<16x64xf32>
    %24 = arith.mulf %23, %16 : vector<16x64xf32>
    %cst_13 = arith.constant -0.284496725 : f32
    %25 = vector.broadcast %cst_13 : f32 to vector<16x64xf32>
    %26 = arith.addf %24, %25 : vector<16x64xf32>
    %27 = arith.mulf %26, %16 : vector<16x64xf32>
    %cst_14 = arith.constant 0.254829586 : f32
    %28 = vector.broadcast %cst_14 : f32 to vector<16x64xf32>
    %29 = arith.addf %27, %28 : vector<16x64xf32>
    %30 = arith.mulf %29, %16 : vector<16x64xf32>
    %cst_15 = arith.constant 0.000000e+00 : f32
    %31 = vector.broadcast %cst_15 : f32 to vector<16x64xf32>
    %32 = arith.subf %31, %10 : vector<16x64xf32>
    %33 = arith.mulf %32, %10 : vector<16x64xf32>
    %34 = math.exp %33 : vector<16x64xf32>
    %35 = arith.mulf %30, %34 : vector<16x64xf32>
    %cst_16 = arith.constant 1.000000e+00 : f32
    %36 = vector.broadcast %cst_16 : f32 to vector<16x64xf32>
    %37 = arith.subf %36, %35 : vector<16x64xf32>
    %cst_17 = arith.constant 0.000000e+00 : f32
    %38 = vector.broadcast %cst_17 : f32 to vector<16x64xf32>
    %39 = arith.cmpf olt, %9, %38 : vector<16x64xf32>
    %cst_18 = arith.constant 0.000000e+00 : f32
    %40 = vector.broadcast %cst_18 : f32 to vector<16x64xf32>
    %41 = arith.subf %40, %37 : vector<16x64xf32>
    %42 = arith.select %39, %41, %37 : vector<16x64xi1>, vector<16x64xf32>
    %cst_19 = arith.constant 1.000000e+00 : f32
    %43 = vector.broadcast %cst_19 : f32 to vector<16x64xf32>
    %44 = arith.addf %43, %42 : vector<16x64xf32>
    %45 = arith.mulf %7, %44 : vector<16x64xf32>
    %c0_20 = arith.constant 0 : index
    %c0_21 = arith.constant 0 : index
    %46 = vector.load %arg4[%c0_20, %c0_21] : memref<64x32xf32, #tpu.memory_space<vmem>>, vector<64x32xf32>
    %cst_22 = arith.constant dense<0.000000e+00> : vector<16x32xf32>
    %47 = tpu.matmul %45, %46, %cst_22 {dimension_numbers = #tpu.dot_dimension_numbers<[1], [0], [0], [1], [0, 0, 1, 1], [], []>} : vector<16x64xf32>, vector<64x32xf32>, vector<16x32xf32> -> vector<16x32xf32>
    %c0_23 = arith.constant 0 : index
    %c0_24 = arith.constant 0 : index
    %48 = vector.load %arg5[%c0_23, %c0_24] : memref<1x32xf32, #tpu.memory_space<vmem>>, vector<1x32xf32>
    %49 = vector.broadcast %48 : vector<1x32xf32> to vector<16x32xf32>
    %50 = arith.addf %47, %49 : vector<16x32xf32>
    %c0_25 = arith.constant 0 : index
    %c0_26 = arith.constant 0 : index
    %51 = vector.load %arg6[%c0_25, %c0_26] : memref<16x32xf32, #tpu.memory_space<vmem>>, vector<16x32xf32>
    tpu.vector_store %arg6[%c0_25, %c0_26], %50 {strides = array<i32>} : memref<16x32xf32, #tpu.memory_space<vmem>>, vector<16x32xf32>,
    return
  }
  func.func @transform_0(%arg0: i32) -> (i32, i32) {
    %c0_i32 = arith.constant 0 : i32
    %c0_i32_0 = arith.constant 0 : i32
    return %arg0, %c0_i32 : i32, i32
  }
  func.func @transform_1(%arg0: i32) -> (i32, i32) {
    %c0_i32 = arith.constant 0 : i32
    %c0_i32_0 = arith.constant 0 : i32
    %c0_i32_1 = arith.constant 0 : i32
    return %c0_i32, %c0_i32_0 : i32, i32
  }
  func.func @transform_2(%arg0: i32) -> (i32, i32) {
    %c0_i32 = arith.constant 0 : i32
    %c0_i32_0 = arith.constant 0 : i32
    %c0_i32_1 = arith.constant 0 : i32
    return %c0_i32, %c0_i32_0 : i32, i32
  }
  func.func @transform_3(%arg0: i32) -> (i32, i32) {
    %c0_i32 = arith.constant 0 : i32
    %c0_i32_0 = arith.constant 0 : i32
    %c0_i32_1 = arith.constant 0 : i32
    return %c0_i32, %c0_i32_0 : i32, i32
  }
  func.func @transform_4(%arg0: i32) -> (i32, i32) {
    %c0_i32 = arith.constant 0 : i32
    %c0_i32_0 = arith.constant 0 : i32
    %c0_i32_1 = arith.constant 0 : i32
    return %c0_i32, %c0_i32_0 : i32, i32
  }
  func.func @transform_5(%arg0: i32) -> (i32, i32) {
    %c0_i32 = arith.constant 0 : i32
    %c0_i32_0 = arith.constant 0 : i32
    return %arg0, %c0_i32 : i32, i32
  }
}

</mosaic_0001>

<llo_original>
// kernel: tpu_custom_call.1
$region0: #{tpu_custom_call.1}
  #allocation0 [shape = 'u32[]', space=smem, size = 0x4, offset = 0x4, fixed_abs, tag = 'smem constant byte address 0x4 - core index']
  #allocation1 [shape = 'u32[72,128]{1,0:T(1,128)}', space=vmem, size = 0x9000, scoped, tag = 'internal scratch']
  %s0 = inlined_call_operand.vmem [shape: f32[16,32], index: 0, kind: input, shape index: {}]
  %s1 = inlined_call_operand.vmem [shape: f32[32,64], index: 1, kind: input, shape index: {}]
  %s2 = inlined_call_operand.vmem [shape: f32[1,64], index: 2, kind: input, shape index: {}]
  %s3 = inlined_call_operand.vmem [shape: f32[64,32], index: 3, kind: input, shape index: {}]
  %s4 = inlined_call_operand.vmem [shape: f32[1,32], index: 4, kind: input, shape index: {}]
  %s5 = inlined_call_operand.hbm [shape: f32[16,32], index: 5, kind: output, shape index: {}]
  %s6 = sld [smem:[#allocation0]]
  $region30: #{tpu_custom_call.1} parent=0
    _
  %s8 = ssub.s32 1, %s6
  %s9 = scalar_select 0, %s8, %s6
  $region1: #{tpu_custom_call.1} parent=0
    #allocation2 [shape = 'u8[8192]{0}', space=vmem, size = 0x2000, scoped, tag = 'output window, operand 0, single buffered']
    #allocation3 [shape = 's32[1]{0}', space=sflag, size = 0x4, scoped, tag = 'scoped memory for tpu_custom_call.1']
    %10 = vsyncpa [#allocation3], 0
    // Predicated region
    $region2: #{tpu_custom_call.1} parent=1 // pred_check
      _
    $region3: #{tpu_custom_call.1} parent=1 // pred_check_branch
      %12 = sbr.rel (0) target = $region5
    $region4: #{tpu_custom_call.1} parent=1 // pred_region
      _
    $region5: #{tpu_custom_call.1} parent=1 // pred_fallthru
      _
    // Predicated region
    $region6: #{tpu_custom_call.1} parent=1 // pred_check
      _
    $region7: #{tpu_custom_call.1} parent=1 // pred_check_branch
      %14 = sbr.rel (0) target = $region9
    $region8: #{tpu_custom_call.1} parent=1 // pred_region
      _
    $region9: #{tpu_custom_call.1} parent=1 // pred_fallthru
      _
    // Predicated region
    $region10: #{tpu_custom_call.1} parent=1 // pred_check
      _
    $region11: #{tpu_custom_call.1} parent=1 // pred_check_branch
      %16 = sbr.rel (0) target = $region13
    $region12: #{tpu_custom_call.1} parent=1 // pred_region
      _
    $region13: #{tpu_custom_call.1} parent=1 // pred_fallthru
      _
    // Predicated region
    $region14: #{tpu_custom_call.1} parent=1 // pred_check
      _
    $region15: #{tpu_custom_call.1} parent=1 // pred_check_branch
      %18 = sbr.rel (0) target = $region17
    $region16: #{tpu_custom_call.1} parent=1 // pred_region
      _
    $region17: #{tpu_custom_call.1} parent=1 // pred_fallthru
      _
    // Predicated region
    $region18: #{tpu_custom_call.1} parent=1 // pred_check
      _
    $region19: #{tpu_custom_call.1} parent=1 // pred_check_branch
      %20 = sbr.rel (0) target = $region21
    $region20: #{tpu_custom_call.1} parent=1 // pred_region
      _
    $region21: #{tpu_custom_call.1} parent=1 // pred_fallthru
      _
    %v21 = vld [vmem:[%s0] sm:$0xff]
    %v22 = vld [vmem:[%s0 + $0x8] sm:$0xff]
    %v23 = vld [vmem:[%s1] sm:$0xff]
    %v24 = vld [vmem:[%s1 + $0x8] sm:$0xff]
    %v25 = vld [vmem:[%s1 + $0x10] sm:$0xff]
    %v26 = vld [vmem:[%s1 + $0x18] sm:$0xff]
    %v27 = vld [vmem:[%s2] sm:$0x1]
    %v29 = vperm.slane %v27, 0
    %vm31 = vcmask 261120
    %v33 = vsel %vm31, %v21, 0
    %v36 = vsel %vm31, %v22, 0
    %38 = vmatpush.msra.mxu0 0.0
    %39 = vmatpush.msra.mxu0 0.0
    %40 = vmatpush.msra.mxu0 0.0
    %41 = vmatpush.msra.mxu0 0.0
    %42 = vmatpush.msra.mxu0 0.0
    %43 = vmatpush.msra.mxu0 0.0
    %44 = vmatpush.msra.mxu0 0.0
    %45 = vmatpush.msra.mxu0 0.0
    %46 = vmatpush.msra.mxu0 0.0
    %47 = vmatpush.msra.mxu0 0.0
    %48 = vmatpush.msra.mxu0 0.0
    %49 = vmatpush.msra.mxu0 0.0
    %50 = vmatpush.msra.mxu0 %v26
    %51 = vmatpush.msra.mxu0 %v25
    %52 = vmatpush.msra.mxu0 %v24
    %53 = vmatpush.msra.mxu0 %v23
    %54 = vmatmul.f32.gmra.mxu0 %v33
    %v55 = vpop.f32.mrf.mxu0
    %v56 = vadd.f32 %v29, %v55
    %57 = vmatmul.f32.gmra.mxu0 %v36
    %v58 = vpop.f32.mrf.mxu0
    %v59 = vadd.f32 %v29, %v58
    %60 = vdwg.mxu0
    %v61 = vmul.f32 %v56, 0.5
    %v62 = vmul.f32 %v59, 0.5
    %v63 = vmul.f32 %v56, 0.70710677
    %v64 = vmul.f32 %v59, 0.70710677
    %v65 = vand.u32 2147483647, %v63
    %v66 = vand.u32 2147483647, %v64
    %v67 = vmul.f32 %v65, 0.3275911
    %v68 = vmul.f32 %v66, 0.3275911
    %v69 = vadd.f32 %v67, 1.0
    %v70 = vadd.f32 %v68, 1.0
    %v71 = vrcp.pop %v69
    %v72 = vmul.f32 %v69, %v71
    %v73 = vsub.f32 1.0, %v72
    %v74 = vmul.f32 %v71, %v73
    %v75 = vadd.f32 %v71, %v74
    %vm76 = vweird.f32 %v69
    %vm77 = vweird.f32 %v71
    %vm78 = vmor %vm76, %vm77
    %v79 = vsel %vm78, %v71, %v75
    %v80 = vand.u32 2147483647, %v69
    %vm81 = vcmp.eq.f32.partialorder %v80, 8.507059e+37
    %v82 = vand.u32 %v69, 2147483648
    %v83 = vor.u32 1.1754944e-38, %v82
    %v84 = vsel %vm81, %v83, %v79
    %v85 = vmul.f32 1.0, %v84
    %v86 = vrcp.pop %v70
    %v87 = vmul.f32 %v70, %v86
    %v88 = vsub.f32 1.0, %v87
    %v89 = vmul.f32 %v86, %v88
    %v90 = vadd.f32 %v86, %v89
    %vm91 = vweird.f32 %v70
    %vm92 = vweird.f32 %v86
    %vm93 = vmor %vm91, %vm92
    %v94 = vsel %vm93, %v86, %v90
    %v95 = vand.u32 2147483647, %v70
    %vm96 = vcmp.eq.f32.partialorder %v95, 8.507059e+37
    %v97 = vand.u32 %v70, 2147483648
    %v98 = vor.u32 1.1754944e-38, %v97
    %v99 = vsel %vm96, %v98, %v94
    %v100 = vmul.f32 1.0, %v99
    %v101 = vmul.f32 %v85, 1.0614054
    %v102 = vmul.f32 %v100, 1.0614054
    %v103 = vadd.f32 %v101, -1.4531521
    %v104 = vadd.f32 %v102, -1.4531521
    %v105 = vmul.f32 %v103, %v85
    %v106 = vmul.f32 %v104, %v100
    %v107 = vadd.f32 %v105, 1.4214138
    %v108 = vadd.f32 %v106, 1.4214138
    %v109 = vmul.f32 %v107, %v85
    %v110 = vmul.f32 %v108, %v100
    %v111 = vadd.f32 %v109, -0.28449672
    %v112 = vadd.f32 %v110, -0.28449672
    %v113 = vmul.f32 %v111, %v85
    %v114 = vmul.f32 %v112, %v100
    %v115 = vadd.f32 %v113, 0.2548296
    %v116 = vadd.f32 %v114, 0.2548296
    %v117 = vmul.f32 %v115, %v85
    %v118 = vmul.f32 %v116, %v100
    %v119 = vsub.f32 0.0, %v65
    %v120 = vsub.f32 0.0, %v66
    %v121 = vmul.f32 %v119, %v65
    %v122 = vmul.f32 %v120, %v66
    %v123 = vmul.f32 %v121, 1.442695
    %v124 = vpow.pop %v123
    %v125 = vmul.f32 %v122, 1.442695
    %v126 = vpow.pop %v125
    %v127 = vmul.f32 %v117, %v124
    %v128 = vmul.f32 %v118, %v126
    %v129 = vsub.f32 1.0, %v127
    %v130 = vsub.f32 1.0, %v128
    %vm131 = vcmp.lt.f32.partialorder %v63, 0.0
    %vm132 = vcmp.lt.f32.partialorder %v64, 0.0
    %v133 = vsub.f32 0.0, %v129
    %v134 = vsub.f32 0.0, %v130
    %v135 = vsel %vm131, %v133, %v129
    %v136 = vsel %vm132, %v134, %v130
    %v137 = vadd.f32 %v135, 1.0
    %v138 = vadd.f32 %v136, 1.0
    %v139 = vmul.f32 %v61, %v137
    %v140 = vmul.f32 %v62, %v138
    %v141 = vld [vmem:[%s3] sm:$0xff]
    %v142 = vld [vmem:[%s3 + $0x8] sm:$0xff]
    %v143 = vld [vmem:[%s3 + $0x10] sm:$0xff]
    %v144 = vld [vmem:[%s3 + $0x18] sm:$0xff]
    %v145 = vld [vmem:[%s3 + $0x20] sm:$0xff]
    %v146 = vld [vmem:[%s3 + $0x28] sm:$0xff]
    %v147 = vld [vmem:[%s3 + $0x30] sm:$0xff]
    %v148 = vld [vmem:[%s3 + $0x38] sm:$0xff]
    %v149 = vld [vmem:[%s4] sm:$0x1]
    %v151 = vperm.slane %v149, 0
    %vm153 = vcmask 523264
    %v155 = vsel %vm153, %v139, 0
    %v158 = vsel %vm153, %v140, 0
    %160 = vmatpush.msra.mxu0 0.0
    %161 = vmatpush.msra.mxu0 0.0
    %162 = vmatpush.msra.mxu0 0.0
    %163 = vmatpush.msra.mxu0 0.0
    %164 = vmatpush.msra.mxu0 0.0
    %165 = vmatpush.msra.mxu0 0.0
    %166 = vmatpush.msra.mxu0 0.0
    %167 = vmatpush.msra.mxu0 0.0
    %168 = vmatpush.msra.mxu0 %v148
    %169 = vmatpush.msra.mxu0 %v147
    %170 = vmatpush.msra.mxu0 %v146
    %171 = vmatpush.msra.mxu0 %v145
    %172 = vmatpush.msra.mxu0 %v144
    %173 = vmatpush.msra.mxu0 %v143
    %174 = vmatpush.msra.mxu0 %v142
    %175 = vmatpush.msra.mxu0 %v141
    %176 = vmatmul.f32.gmra.mxu0 %v155
    %v177 = vpop.f32.mrf.mxu0
    %v178 = vadd.f32 %v151, %v177
    %179 = vmatmul.f32.gmra.mxu0 %v158
    %v180 = vpop.f32.mrf.mxu0
    %v181 = vadd.f32 %v151, %v180
    %182 = vdwg.mxu0
    %183 = vst.msk [vmem:[#allocation2] sm:$0xff] %vm31, %v178
    %184 = vst.msk [vmem:[#allocation2 + $0x8] sm:$0xff] %vm31, %v181
    // Predicated region
    $region22: #{tpu_custom_call.1} parent=1 // pred_check
      _
    $region23: #{tpu_custom_call.1} parent=1 // pred_check_branch
      %186 = sbr.rel (0) target = $region25
    $region24: #{tpu_custom_call.1} parent=1 // pred_region
      %188 = vsyncadd [#allocation3], 0
      %s189 = sshll.u32 [#allocation2], 4
      %s190 = int_to_ptr.vmem [resolvable:$true] %s189
      %s191 = sshll.u32 %s5, 4
      %s192 = int_to_ptr.hbm [resolvable:$true] %s191
      %197 = dma.vmem_to_hbm [thread:$0]  %s190, 256, %s192, [#allocation3], 128, 128, 8
    $region25: #{tpu_custom_call.1} parent=1 // pred_fallthru
      _
    // Predicated region
    $region26: #{tpu_custom_call.1} parent=1 // pred_check
      _
    $region27: #{tpu_custom_call.1} parent=1 // pred_check_branch
      %199 = sbr.rel (0) target = $region29
    $region28: #{tpu_custom_call.1} parent=1 // pred_region
      %201 = dma.done [#allocation3], 256
    $region29: #{tpu_custom_call.1} parent=1 // pred_fallthru
      _
    %202 = vsyncpa [#allocation3], 1

</llo_original>
